<compile_context>
chip_gen: v7x
topology: tpu7x:2x2x1
jax: 0.10.0
libtpu: 0.0.40
codegen_flags: <defaults>
</compile_context>

<pallas_src>
from functools import partial

import jax
import jax.numpy as jnp
from jax import lax
from jax.experimental import pallas as pl
from jax.experimental.pallas import tpu as pltpu

# Safe on every generation: <= default scoped VMEM on v6e/v7x, raises v5e's 16 MiB.
_VMEM_LIMIT = 32 * 1024 * 1024
# Budget (double-buffered blocks) under which the weight-resident linear is used.
_RESIDENT_WEIGHT_BUDGET = 16 * 1024 * 1024


def _pick_tile(dim, candidates):
    """Largest candidate tile that divides `dim` exactly, else the full dim."""
    for c in candidates:
        if dim >= c and dim % c == 0:
            return c
    return dim


# ---------------------------------------------------------------------------
# Kernel 1: bias-free linear layer, o = x @ w.T  (matches torch.nn.Linear)
# ---------------------------------------------------------------------------
def _linear_resident_kernel(x_ref, w_ref, o_ref, *, compute_dtype):
    # Weight block index is constant -> the (N, K) weight is DMA'd once and
    # stays VMEM-resident while (tm, K) x tiles stream past it.
    x = x_ref[...].astype(compute_dtype)          # (tm, K)
    w = w_ref[...].astype(compute_dtype)          # (N, K)
    o_ref[...] = lax.dot_general(
        x, w, dimension_numbers=(((1,), (1,)), ((), ())),
        preferred_element_type=jnp.float32).astype(o_ref.dtype)


def _linear_tiled_kernel(x_ref, w_ref, o_ref, acc_ref, *, compute_dtype):
    @pl.when(pl.program_id(2) == 0)
    def _():
        acc_ref[...] = jnp.zeros_like(acc_ref)

    x = x_ref[...].astype(compute_dtype)          # (tm, tk)
    w = w_ref[...].astype(compute_dtype)          # (tn, tk)
    # Contract K of x against K of w: MXU consumes the (N, K) layout directly.
    acc_ref[...] += lax.dot_general(
        x, w, dimension_numbers=(((1,), (1,)), ((), ())),
        preferred_element_type=jnp.float32)

    @pl.when(pl.program_id(2) == pl.num_programs(2) - 1)
    def _():
        o_ref[...] = acc_ref[...].astype(o_ref.dtype)


def linear_no_bias(x, w, *, out_dtype=None, compute_dtype=jnp.bfloat16):
    """x: (M, K), w: (N, K)  ->  x @ w.T : (M, N) emitted in `out_dtype`."""
    M, K = x.shape
    N, K2 = w.shape
    assert K == K2
    if out_dtype is None:
        out_dtype = x.dtype

    tm = _pick_tile(M, (512, 256, 128))
    resident_vmem = 2 * (tm * K * x.dtype.itemsize
                         + N * K * w.dtype.itemsize
                         + tm * N * jnp.dtype(out_dtype).itemsize)
    if resident_vmem <= _RESIDENT_WEIGHT_BUDGET:
        # Weight-resident fast path: no K grid axis, no accumulator, the weight
        # is not re-DMA'd per M tile.
        return pl.pallas_call(
            partial(_linear_resident_kernel, compute_dtype=compute_dtype),
            out_shape=jax.ShapeDtypeStruct((M, N), out_dtype),
            grid=(pl.cdiv(M, tm),),
            in_specs=[
                pl.BlockSpec((tm, K), lambda i: (i, 0)),
                pl.BlockSpec((N, K), lambda i: (0, 0)),
            ],
            out_specs=pl.BlockSpec((tm, N), lambda i: (i, 0)),
            compiler_params=pltpu.CompilerParams(
                dimension_semantics=("parallel",),
                vmem_limit_bytes=_VMEM_LIMIT),
        )(x, w)

    # General tiled fallback (large weights): 3-axis grid with f32 accumulator.
    tn = _pick_tile(N, (512, 256, 128))
    tk = _pick_tile(K, (1024, 512, 256, 128))
    return pl.pallas_call(
        partial(_linear_tiled_kernel, compute_dtype=compute_dtype),
        out_shape=jax.ShapeDtypeStruct((M, N), out_dtype),
        grid=(pl.cdiv(M, tm), pl.cdiv(N, tn), K // tk),
        in_specs=[
            pl.BlockSpec((tm, tk), lambda i, j, k: (i, k)),
            pl.BlockSpec((tn, tk), lambda i, j, k: (j, k)),
        ],
        out_specs=pl.BlockSpec((tm, tn), lambda i, j, k: (i, j)),
        scratch_shapes=[pltpu.VMEM((tm, tn), jnp.float32)],
        compiler_params=pltpu.CompilerParams(
            dimension_semantics=("parallel", "parallel", "arbitrary"),
            vmem_limit_bytes=_VMEM_LIMIT),
    )(x, w)


# ---------------------------------------------------------------------------
# Kernel 2: flash-style multi-head attention.
#   grid = (bs, q_tiles, kv_tiles); heads sliced in-kernel from (T, E) blocks;
#   online softmax with per-head m/l and a (Tq, E) accumulator in VMEM scratch;
#   single lane-dense (Tq, E) output store on the last kv step.
# ---------------------------------------------------------------------------
def _mha_flash_kernel(*refs, num_heads, head_dim, scale, use_mask, approx_recip):
    if use_mask:
        q_ref, k_ref, v_ref, m_ref, o_ref, m_sc, l_sc, acc_sc = refs
    else:
        q_ref, k_ref, v_ref, o_ref, m_sc, l_sc, acc_sc = refs

    kv = pl.program_id(2)

    @pl.when(kv == 0)
    def _():
        m_sc[...] = jnp.full(m_sc.shape, -jnp.inf, jnp.float32)
        l_sc[...] = jnp.zeros(l_sc.shape, jnp.float32)
        acc_sc[...] = jnp.zeros(acc_sc.shape, jnp.float32)

    if use_mask:
        # Hoisted out of the unrolled head loop (JAX does not CSE broadcasts).
        bias = jnp.where(m_ref[...] == 0, jnp.float32(-1e20), jnp.float32(0.0))  # (1, tk)

    # Fold the softmax scale into q once per grid step (cheaper than scaling
    # the (tq, tk) scores per head).
    q_all = q_ref[...]
    q_all = (q_all.astype(jnp.float32) * scale).astype(q_all.dtype)   # (tq, E)
    k_all = k_ref[...]                                                # (tk, E)
    v_all = v_ref[...]                                                # (tk, E)

    for h in range(num_heads):                                        # static unroll
        sl = slice(h * head_dim, (h + 1) * head_dim)
        qh = q_all[:, sl]
        kh = k_all[:, sl]
        vh = v_all[:, sl]
        # energy = q_h @ k_h.T (contract head_dim; no explicit transpose)
        s = lax.dot_general(qh, kh, dimension_numbers=(((1,), (1,)), ((), ())),
                            preferred_element_type=jnp.float32)       # (tq, tk)
        if use_mask:
            s = s + bias
        m_prev = m_sc[h]                                              # (tq, 1)
        l_prev = l_sc[h]
        m_new = jnp.maximum(m_prev, jnp.max(s, axis=-1, keepdims=True))
        alpha = jnp.exp(m_prev - m_new)
        p = jnp.exp(s - m_new)                                        # (tq, tk)
        l_sc[h] = alpha * l_prev + jnp.sum(p, axis=-1, keepdims=True)
        pv = jnp.dot(p.astype(vh.dtype), vh,
                     preferred_element_type=jnp.float32)              # (tq, hd)
        acc_sc[:, sl] = alpha * acc_sc[:, sl] + pv
        m_sc[h] = m_new

    @pl.when(kv == pl.num_programs(2) - 1)
    def _():
        # Per-head normalization in scratch, then one lane-dense (tq, E) store.
        for h in range(num_heads):
            sl = slice(h * head_dim, (h + 1) * head_dim)
            inv = pl.reciprocal(l_sc[h], approx=approx_recip)
            acc_sc[:, sl] = acc_sc[:, sl] * inv
        o_ref[...] = acc_sc[...].astype(o_ref.dtype)


def multihead_attention(Qp, Kp, Vp, key_mask, *, embed_dim, num_heads, scale,
                        out_dtype, blocks=(0, 0, 0)):
    """Qp/Kp/Vp: (bs, S, E) activations (or the packed (bs, S, 3E) QKV array
    passed three times with `blocks=(0, 1, 2)` lane-block offsets).
    key_mask: (bs, 1, Sk) int32 or None."""
    bs, sq = Qp.shape[0], Qp.shape[1]
    sk = Kp.shape[1]
    E = embed_dim
    head_dim = E // num_heads
    tq = _pick_tile(sq, (256, 128))          # >=256 keeps the MXU fed; capped for v7x
    tk = _pick_tile(sk, (512, 256, 128))
    use_mask = key_mask is not None
    qb, kb, vb = blocks

    in_specs = [
        pl.BlockSpec((None, tq, E), lambda b, qi, ki: (b, qi, qb)),
        pl.BlockSpec((None, tk, E), lambda b, qi, ki: (b, ki, kb)),
        pl.BlockSpec((None, tk, E), lambda b, qi, ki: (b, ki, vb)),
    ]
    args = [Qp, Kp, Vp]
    if use_mask:
        in_specs.append(pl.BlockSpec((None, 1, tk), lambda b, qi, ki: (b, 0, ki)))
        args.append(key_mask)

    kernel = partial(
        _mha_flash_kernel, num_heads=num_heads, head_dim=head_dim, scale=scale,
        use_mask=use_mask,
        approx_recip=(jnp.dtype(out_dtype) != jnp.dtype(jnp.float32)))

    return pl.pallas_call(
        kernel,
        out_shape=jax.ShapeDtypeStruct((bs, sq, E), out_dtype),
        grid=(bs, sq // tq, sk // tk),
        in_specs=in_specs,
        out_specs=pl.BlockSpec((None, tq, E), lambda b, qi, ki: (b, qi, 0)),
        scratch_shapes=[
            pltpu.VMEM((num_heads, tq, 1), jnp.float32),   # running max m
            pltpu.VMEM((num_heads, tq, 1), jnp.float32),   # running sum l
            pltpu.VMEM((tq, E), jnp.float32),              # output accumulator
        ],
        compiler_params=pltpu.CompilerParams(
            dimension_semantics=("parallel", "parallel", "arbitrary"),
            vmem_limit_bytes=_VMEM_LIMIT),
    )(*args)


# ---------------------------------------------------------------------------
# Full forward
# ---------------------------------------------------------------------------
def _key_padding_mask(mask, bs, sk):
    m = jnp.asarray(mask)
    if m.ndim == 4:
        # torch-style mask broadcastable to (bs, H, Sq, Sk); the compact fast
        # path supports key-padding masks (head / query dims of size 1).
        # TODO(synk): support masks that vary over heads / query positions.
        assert m.shape[1] == 1 and m.shape[2] == 1, "only key-padding masks supported"
        m = m[:, 0, :, :]                      # (bs or 1, 1, sk)
    elif m.ndim == 2:                          # (bs, sk)
        m = m[:, None, :]
    elif m.ndim == 1:                          # (sk,)
        m = m[None, None, :]
    return jnp.broadcast_to(m, (bs, 1, sk)).astype(jnp.int32)


def attention_forward(Q, K, V, mask, params, num_heads,
                      compute_dtype=jnp.bfloat16):
    bs, sq, E = Q.shape
    sk = K.shape[1]
    sv = V.shape[1]
    assert sk == sv, "key/value sequence lengths must match"
    head_dim = E // num_heads
    assert head_dim * num_heads == E, "embed_dim must be divisible by num_heads"
    out_dtype = Q.dtype
    scale = 1.0 / (float(E) ** 0.5)

    # Pre-cast weights once outside the kernels: half the weight DMA bytes and
    # no per-tile VPU casts inside the GEMMs.
    wq = params["wq"].astype(compute_dtype)
    wk = params["wk"].astype(compute_dtype)
    wv = params["wv"].astype(compute_dtype)
    wfc = params["wfc"].astype(compute_dtype)

    key_mask = None if mask is None else _key_padding_mask(mask, bs, sk)

    if (Q is K) and (K is V):
        # self-attention: one fused GEMM against the concatenated (3E, E) weight
        w_qkv = jnp.concatenate([wq, wk, wv], axis=0)
        qkv = linear_no_bias(Q.reshape(-1, E), w_qkv, out_dtype=compute_dtype,
                             compute_dtype=compute_dtype).reshape(bs, sq, 3 * E)
        if E % 128 == 0:
            # Heads come straight out of the packed (bs, S, 3E) activation via
            # BlockSpec lane-block offsets 0/1/2 — no slice copies in HBM.
            attn_out = multihead_attention(
                qkv, qkv, qkv, key_mask, embed_dim=E, num_heads=num_heads,
                scale=scale, out_dtype=compute_dtype, blocks=(0, 1, 2))
        else:
            Qp = qkv[..., :E]
            Kp = qkv[..., E:2 * E]
            Vp = qkv[..., 2 * E:]
            attn_out = multihead_attention(
                Qp, Kp, Vp, key_mask, embed_dim=E, num_heads=num_heads,
                scale=scale, out_dtype=compute_dtype)
    else:
        Qp = linear_no_bias(Q.reshape(-1, E), wq, out_dtype=compute_dtype,
                            compute_dtype=compute_dtype).reshape(bs, sq, E)
        Kp = linear_no_bias(K.reshape(-1, E), wk, out_dtype=compute_dtype,
                            compute_dtype=compute_dtype).reshape(bs, sk, E)
        Vp = linear_no_bias(V.reshape(-1, E), wv, out_dtype=compute_dtype,
                            compute_dtype=compute_dtype).reshape(bs, sv, E)
        attn_out = multihead_attention(
            Qp, Kp, Vp, key_mask, embed_dim=E, num_heads=num_heads,
            scale=scale, out_dtype=compute_dtype)

    # Final projection back to the caller's dtype.
    out = linear_no_bias(attn_out.reshape(-1, E), wfc, out_dtype=out_dtype,
                         compute_dtype=compute_dtype)
    return out.reshape(bs, sq, E)


# ---------------------------------------------------------------------------
# Pure-JAX reference (mirrors the torch einsum path) for correctness checking
# ---------------------------------------------------------------------------
def attention_reference(Q, K, V, mask, params, num_heads):
    bs, sq, E = Q.shape
    sk = K.shape[1]
    hd = E // num_heads
    Qp = (Q.reshape(-1, E) @ params["wq"].T).reshape(bs, sq, num_heads, hd)
    Kp = (K.reshape(-1, E) @ params["wk"].T).reshape(bs, sk, num_heads, hd)
    Vp = (V.reshape(-1, E) @ params["wv"].T).reshape(bs, sk, num_heads, hd)
    energy = jnp.einsum("nqhd,nkhd->nhqk", Qp, Kp)
    if mask is not None:
        energy = jnp.where(mask == 0, jnp.float32(-1e20), energy)
    attn = jax.nn.softmax(energy / (float(E) ** 0.5), axis=3)
    out = jnp.einsum("nhql,nlhd->nqhd", attn, Vp).reshape(bs, sq, E)
    return out @ params["wfc"].T


if __name__ == "__main__":
    # small shapes consistent with the module (embed_dim divisible by num_heads)
    bs, seq, embed_dim, num_heads = 2, 8, 32, 4

    key = jax.random.PRNGKey(0)
    kq, kk, kv_, k1, k2, k3, k4, k5, k6 = jax.random.split(key, 9)

    # deterministic synthetic parameters (nn.Linear weight shape: (out, in))
    params = {
        "wq": jax.random.normal(k1, (embed_dim, embed_dim), jnp.float32) * 0.05,
        "wk": jax.random.normal(k2, (embed_dim, embed_dim), jnp.float32) * 0.05,
        "wv": jax.random.normal(k3, (embed_dim, embed_dim), jnp.float32) * 0.05,
        "wfc": jax.random.normal(k4, (embed_dim, embed_dim), jnp.float32) * 0.05,
    }

    Q = jax.random.normal(kq, (bs, seq, embed_dim), jnp.float32)
    K = jax.random.normal(kk, (bs, seq, embed_dim), jnp.float32)
    V = jax.random.normal(kv_, (bs, seq, embed_dim), jnp.float32)
    # key-padding style mask: last 2 key positions masked out (broadcasts like torch)
    mask = jnp.ones((bs, 1, 1, seq), jnp.int32).at[:, :, :, -2:].set(0)

    # 1) cross-attention, key-padding mask, bf16 compute (default / production path)
    out = attention_forward(Q, K, V, mask, params, num_heads)
    out = jax.block_until_ready(out)
    ref = attention_reference(Q, K, V, mask, params, num_heads)
    assert out.shape == (bs, seq, embed_dim)
    assert out.dtype == Q.dtype
    assert jnp.allclose(out, ref, rtol=3e-2, atol=1e-2), "bf16 path mismatch vs reference"

    # 2) self-attention (fused QKV, weight-resident GEMM), no mask, f32 compute
    out2 = attention_forward(Q, Q, Q, None, params, num_heads,
                             compute_dtype=jnp.float32)
    out2 = jax.block_until_ready(out2)
    ref2 = attention_reference(Q, Q, Q, None, params, num_heads)
    assert jnp.allclose(out2, ref2, rtol=1e-2, atol=5e-3), "f32 path mismatch vs reference"

    # 3) E % 128 == 0: packed-QKV attention-input path (no slice copies), f32 compute
    E3, H3 = 128, 4
    params3 = {
        "wq": jax.random.normal(k5, (E3, E3), jnp.float32) * 0.05,
        "wk": jax.random.normal(k6, (E3, E3), jnp.float32) * 0.05,
        "wv": jax.random.normal(k1, (E3, E3), jnp.float32) * 0.05,
        "wfc": jax.random.normal(k2, (E3, E3), jnp.float32) * 0.05,
    }
    X3 = jax.random.normal(k3, (bs, seq, E3), jnp.float32)
    mask3 = jnp.ones((bs, 1, 1, seq), jnp.int32).at[:, :, :, -3:].set(0)
    out3 = attention_forward(X3, X3, X3, mask3, params3, H3,
                             compute_dtype=jnp.float32)
    out3 = jax.block_until_ready(out3)
    ref3 = attention_reference(X3, X3, X3, mask3, params3, H3)
    assert jnp.allclose(out3, ref3, rtol=1e-2, atol=5e-3), "packed-QKV path mismatch vs reference"

    print("KERNEL_OK")
</pallas_src>

<mosaic_0001>
module attributes {stable_mosaic.version = 11 : i64} {
  func.func @_linear_resident_kernel(%arg0: i32, %arg1: memref<16x32xf32, #tpu.memory_space<vmem>>, %arg2: memref<32x32xbf16, #tpu.memory_space<vmem>>, %arg3: memref<16x32xbf16, #tpu.memory_space<vmem>>) attributes {dimension_semantics = [#tpu.dimension_semantics<parallel>], iteration_bounds = array<i64: 1>, scalar_prefetch = 0 : i64, scratch_operands = 0 : i64, tpu.core_type = #tpu.core_type<tc>, window_params = [{transform_indices = @transform_0, window_bounds = array<i64: 16, 32>}, {pipeline_mode = #tpu.pipeline_mode<synchronous>, transform_indices = @transform_1, window_bounds = array<i64: 32, 32>}, {transform_indices = @transform_2, window_bounds = array<i64: 16, 32>}]} {
    %c0 = arith.constant 0 : index
    %c0_0 = arith.constant 0 : index
    %0 = vector.load %arg1[%c0, %c0_0] : memref<16x32xf32, #tpu.memory_space<vmem>>, vector<16x32xf32>
    %1 = arith.truncf %0 : vector<16x32xf32> to vector<16x32xbf16>
    %c0_1 = arith.constant 0 : index
    %c0_2 = arith.constant 0 : index
    %2 = vector.load %arg2[%c0_1, %c0_2] : memref<32x32xbf16, #tpu.memory_space<vmem>>, vector<32x32xbf16>
    %cst = arith.constant dense<0.000000e+00> : vector<16x32xf32>
    %3 = tpu.matmul %1, %2, %cst {dimension_numbers = #tpu.dot_dimension_numbers<[1], [1], [0], [0], [0, 0, 1, 0], [], []>} : vector<16x32xbf16>, vector<32x32xbf16>, vector<16x32xf32> -> vector<16x32xf32>
    %4 = arith.truncf %3 : vector<16x32xf32> to vector<16x32xbf16>
    %c0_3 = arith.constant 0 : index
    %c0_4 = arith.constant 0 : index
    %5 = vector.load %arg3[%c0_3, %c0_4] : memref<16x32xbf16, #tpu.memory_space<vmem>>, vector<16x32xbf16>
    tpu.vector_store %arg3[%c0_3, %c0_4], %4 {strides = array<i32>} : memref<16x32xbf16, #tpu.memory_space<vmem>>, vector<16x32xbf16>,
    return
  }
  func.func @transform_0(%arg0: i32) -> (i32, i32) {
    %c0_i32 = arith.constant 0 : i32
    %c0_i32_0 = arith.constant 0 : i32
    return %arg0, %c0_i32 : i32, i32
  }
  func.func @transform_1(%arg0: i32) -> (i32, i32) {
    %c0_i32 = arith.constant 0 : i32
    %c0_i32_0 = arith.constant 0 : i32
    %c0_i32_1 = arith.constant 0 : i32
    return %c0_i32, %c0_i32_0 : i32, i32
  }
  func.func @transform_2(%arg0: i32) -> (i32, i32) {
    %c0_i32 = arith.constant 0 : i32
    %c0_i32_0 = arith.constant 0 : i32
    return %arg0, %c0_i32 : i32, i32
  }
}

</mosaic_0001>

<llo_original>
// kernel: tpu_custom_call.1
$region0: #{tpu_custom_call.1}
  #allocation0 [shape = 'u32[]', space=smem, size = 0x4, offset = 0x4, fixed_abs, tag = 'smem constant byte address 0x4 - core index']
  #allocation1 [shape = 'u32[144,128]{1,0:T(1,128)}', space=vmem, size = 0x12000, scoped, tag = 'internal scratch']
  %s0 = inlined_call_operand.hbm [shape: f32[16,32], index: 0, kind: input, shape index: {}]
  %s1 = inlined_call_operand.hbm [shape: bf16[32,32], index: 1, kind: input, shape index: {}]
  %s2 = inlined_call_operand.hbm [shape: bf16[16,32], index: 2, kind: output, shape index: {}]
  %s3 = sld [smem:[#allocation0]]
  $region26: #{tpu_custom_call.1} parent=0
    _
  %s5 = ssub.s32 1, %s3
  %s6 = scalar_select 0, %s5, %s3
  $region1: #{tpu_custom_call.1} parent=0
    #allocation2 [shape = 'u8[8192]{0}', space=vmem, size = 0x2000, scoped, tag = 'input window, operand 0, single buffered']
    #allocation3 [shape = 's32[1]{0}', space=sflag, size = 0x4, scoped, tag = 'scoped memory for tpu_custom_call.1']
    #allocation4 [shape = 's32[1]{0}', space=sflag, size = 0x4, scoped, tag = 'scoped memory for tpu_custom_call.1']
    #allocation5 [shape = 'u8[8192]{0}', space=vmem, size = 0x2000, scoped, tag = 'input window, operand 1, single buffered']
    #allocation6 [shape = 's32[1]{0}', space=sflag, size = 0x4, scoped, tag = 'scoped memory for tpu_custom_call.1']
    #allocation7 [shape = 'u8[4096]{0}', space=vmem, size = 0x1000, scoped, tag = 'output window, operand 0, single buffered']
    %7 = vsyncpa [#allocation3], 0
    %8 = vsyncpa [#allocation6], 0
    %9 = vsyncpa [#allocation4], 0
    // Predicated region
    $region2: #{tpu_custom_call.1} parent=1 // pred_check
      _
    $region3: #{tpu_custom_call.1} parent=1 // pred_check_branch
      %11 = sbr.rel (0) target = $region5
    $region4: #{tpu_custom_call.1} parent=1 // pred_region
      %s13 = ssub.s32 256, 256
      %14 = vsyncadd [#allocation3], %s13
      %s15 = sshll.u32 [#allocation2], 4
      %s16 = int_to_ptr.vmem [resolvable:$true] %s15
      %21 = dma.hbm_to_vmem [thread:$0]  %s0, 256, %s16, [#allocation3], 128, 128, 8
    $region5: #{tpu_custom_call.1} parent=1 // pred_fallthru
      _
    // Predicated region
    $region6: #{tpu_custom_call.1} parent=1 // pred_check
      _
    $region7: #{tpu_custom_call.1} parent=1 // pred_check_branch
      %23 = sbr.rel (0) target = $region9
    $region8: #{tpu_custom_call.1} parent=1 // pred_region
      %s25 = ssub.s32 256, 256
      %26 = vsyncadd [#allocation6], %s25
      %s27 = sshll.u32 [#allocation5], 4
      %s28 = int_to_ptr.vmem [resolvable:$true] %s27
      %33 = dma.hbm_to_vmem [thread:$0]  %s1, 256, %s28, [#allocation6], 64, 64, 4
    $region9: #{tpu_custom_call.1} parent=1 // pred_fallthru
      _
    // Predicated region
    $region10: #{tpu_custom_call.1} parent=1 // pred_check
      _
    $region11: #{tpu_custom_call.1} parent=1 // pred_check_branch
      %35 = sbr.rel (0) target = $region13
    $region12: #{tpu_custom_call.1} parent=1 // pred_region
      %36 = dma.done [#allocation3], 256
    $region13: #{tpu_custom_call.1} parent=1 // pred_fallthru
      _
    // Predicated region
    $region14: #{tpu_custom_call.1} parent=1 // pred_check
      _
    $region15: #{tpu_custom_call.1} parent=1 // pred_check_branch
      %38 = sbr.rel (0) target = $region17
    $region16: #{tpu_custom_call.1} parent=1 // pred_region
      %39 = dma.done [#allocation6], 256
    $region17: #{tpu_custom_call.1} parent=1 // pred_fallthru
      _
    %v41 = vld [vmem:[#allocation2] sm:$0xff]
    %v42 = vld [vmem:[#allocation2 + $0x8] sm:$0xff]
    %v43 = vpack.c.bf16 %v42, %v41
    %v44 = vld [vmem:[#allocation5] sm:$0xf]
    %v45 = vld [vmem:[#allocation5 + $0x4] sm:$0xf]
    %v46 = vld [vmem:[#allocation5 + $0x8] sm:$0xf]
    %v47 = vld [vmem:[#allocation5 + $0xc] sm:$0xf]
    %v52 = vunpack.c.l.b16 %v44
    %v53 = vunpack.c.l.b16 %v45
    %v54 = vunpack.c.l.b16 %v46
    %v55 = vunpack.c.l.b16 %v47
    %v56 = vpack.c.b16 %v53, %v52
    %v57 = vpack.c.b16 %v55, %v54
    %vm58 = vcmask 261120
    %v60 = vsel %vm58, %v43, 0
    %v63 = vsel %vm58, %v56, 0
    %v66 = vsel %vm58, %v57, 0
    %68 = vmatprep.subr.bf16.mxu0 0
    %69 = vmatpush1.bf16.xpose.msra.mxu0 %v63
    %70 = vmatprep.subr.bf16.mxu0 0
    %71 = vmatpush1.bf16.xpose.msra.mxu0 %v66
    %72 = vmatprep.subr.bf16.mxu0 0
    %73 = vmatpush1.bf16.xpose.msra.mxu0 0
    %74 = vmatprep.subr.bf16.mxu0 0
    %75 = vmatpush1.bf16.xpose.msra.mxu0 0
    %76 = vmatprep.subr.bf16.mxu0 0
    %77 = vmatpush1.bf16.xpose.msra.mxu0 0
    %78 = vmatprep.subr.bf16.mxu0 0
    %79 = vmatpush1.bf16.xpose.msra.mxu0 0
    %80 = vmatprep.subr.bf16.mxu0 0
    %81 = vmatpush1.bf16.xpose.msra.mxu0 0
    %82 = vmatprep.subr.bf16.mxu0 0
    %83 = vmatpush1.bf16.xpose.msra.mxu0 0
    %84 = vmatprep.subr.bf16.mxu0 0
    %85 = vmatpush1.bf16.xpose.msra.mxu0 0
    %86 = vmatprep.subr.bf16.mxu0 0
    %87 = vmatpush1.bf16.xpose.msra.mxu0 0
    %88 = vmatprep.subr.bf16.mxu0 0
    %89 = vmatpush1.bf16.xpose.msra.mxu0 0
    %90 = vmatprep.subr.bf16.mxu0 0
    %91 = vmatpush1.bf16.xpose.msra.mxu0 0
    %92 = vmatprep.subr.bf16.mxu0 0
    %93 = vmatpush1.bf16.xpose.msra.mxu0 0
    %94 = vmatprep.subr.bf16.mxu0 0
    %95 = vmatpush1.bf16.xpose.msra.mxu0 0
    %96 = vmatprep.subr.bf16.mxu0 0
    %97 = vmatpush1.bf16.xpose.msra.mxu0 0
    %98 = vmatprep.subr.bf16.mxu0 0
    %99 = vmatpush1.bf16.xpose.msra.mxu0 0
    %100 = vmatprep.mubr.bf16.mxu0 0
    %101 = vmatmul.mubr.bf16.gmra.mrb[0].mxu0 %v60
    %v102 = vpop.f32.mrb[0].mxu0
    %v103 = vadd.f32 0.0, %v102
    %v104 = vpop.f32.mrb[0].mxu0
    %v105 = vpop.f32.mrb[0].mxu0
    %v106 = vadd.f32 0.0, %v105
    %v107 = vpop.f32.mrb[0].mxu0
    %108 = vdwg.mxu0
    %v109 = vpack.c.bf16 %v106, %v103
    %v111 = vunpack.c.l.b16 %v109
    %v112 = vunpack.c.h.b16 %v109
    %v113 = vpack.c.b16 %v111, %v111
    %v114 = vpack.c.b16 %v112, %v112
    %vm117 = vcmask 257024
    %118 = vst.msk [vmem:[#allocation7] sm:$0xf] %vm117, %v113
    %119 = vst.msk [vmem:[#allocation7 + $0x4] sm:$0xf] %vm117, %v114
    // Predicated region
    $region18: #{tpu_custom_call.1} parent=1 // pred_check
      _
    $region19: #{tpu_custom_call.1} parent=1 // pred_check_branch
      %121 = sbr.rel (0) target = $region21
    $region20: #{tpu_custom_call.1} parent=1 // pred_region
      %s123 = ssub.s32 128, 128
      %124 = vsyncadd [#allocation4], %s123
      %s125 = sshll.u32 [#allocation7], 4
      %s126 = int_to_ptr.vmem [resolvable:$true] %s125
      %131 = dma.vmem_to_hbm [thread:$0]  %s126, 128, %s2, [#allocation4], 64, 64, 4
    $region21: #{tpu_custom_call.1} parent=1 // pred_fallthru
      _
    // Predicated region
    $region22: #{tpu_custom_call.1} parent=1 // pred_check
      _
    $region23: #{tpu_custom_call.1} parent=1 // pred_check_branch
      %133 = sbr.rel (0) target = $region25
    $region24: #{tpu_custom_call.1} parent=1 // pred_region
      %134 = dma.done [#allocation4], 128
    $region25: #{tpu_custom_call.1} parent=1 // pred_fallthru
      _
    %135 = vsyncpa [#allocation3], 1
    %136 = vsyncpa [#allocation6], 1
    %137 = vsyncpa [#allocation4], 1

</llo_original>
